<compile_context>
chip_gen: v5e
topology: v5e:2x2
jax: 0.10.0
libtpu: 0.0.40
codegen_flags: <defaults>
</compile_context>

<pallas_src>
import jax
import jax.numpy as jnp
from jax import lax
from jax.experimental import pallas as pl
from jax.experimental.pallas import tpu as pltpu


def rnn_head_kernel(ids_ref, table_ref, wih_t_ref, whh_t_ref, bih_ref, bhh_ref,
                    wout_t_ref, bout_ref, out_ref):
    # ids_ref:    (T*B, 1) int32, time-major (row = t*B + b)
    # table_ref:  (V, E) f32 embedding table
    # wih_t_ref:  (E, H)  == W_ih^T   (pre-transposed in the wrapper)
    # whh_t_ref:  (H, H)  == W_hh^T
    # bih/bhh:    (1, H)
    # wout_t_ref: (H, O)  == W_out^T
    # bout_ref:   (1, O)
    # out_ref:    (B, O) softmax probabilities
    TB = ids_ref.shape[0]
    V = table_ref.shape[0]
    B = out_ref.shape[0]
    T = TB // B
    H = whh_t_ref.shape[0]

    # ---- ids-INDEPENDENT: fold the input projection into the table once.
    # (V,E)@(E,H) -> (V,H).  This MXU push overlaps the one-hot build below. ----
    proj = jnp.dot(table_ref[...], wih_t_ref[...],
                   preferred_element_type=jnp.float32)                   # (V, H)

    # ---- Fused embedding lookup + projection: single one-hot matmul.
    # Robust (no dynamic-gather lowering) and removes one matmul from the
    # ids-dependent chain feeding the serial recurrence. ----
    ids = ids_ref[...]                                                    # (T*B, 1)
    onehot = (lax.broadcasted_iota(jnp.int32, (TB, V), 1) == ids).astype(jnp.float32)
    bias = bih_ref[...] + bhh_ref[...]                                    # (1, H)
    xp = jnp.dot(onehot, proj, preferred_element_type=jnp.float32) + bias  # (T*B, H)

    # ---- Serial Elman recurrence (torch.nn.RNN default: tanh, h0 = 0).
    # Only h @ W_hh^T + tanh remain on the critical path; W_hh^T is already
    # materialized so each step is a plain A @ B (no per-step XLU transpose).
    # T is small and static -> fully unrolled for LLO scheduling visibility. ----
    whh_t = whh_t_ref[...]
    h = jnp.zeros((B, H), jnp.float32)
    for t in range(T):
        h = jnp.tanh(xp[t * B:(t + 1) * B, :]
                     + jnp.dot(h, whh_t, preferred_element_type=jnp.float32))

    # ---- logits = Linear(output[:, -1]) ; output[:, -1] == final hidden h ----
    logits = jnp.dot(h, wout_t_ref[...],
                     preferred_element_type=jnp.float32) + bout_ref[...]  # (B, O)

    # ---- softmax over dim=1: EUP approx reciprocal + one Newton step
    # (off the recurrence chain; refinement keeps 1e-5 vs the reference). ----
    m = jnp.max(logits, axis=1, keepdims=True)
    e = jnp.exp(logits - m)
    s = jnp.sum(e, axis=1, keepdims=True)
    inv = pl.reciprocal(s, approx=True)
    inv = inv * (2.0 - s * inv)          # one Newton-Raphson refinement
    out_ref[...] = e * inv


def rnn_model_forward(x_ids, emb_table, w_ih, w_hh, b_ih, b_hh, w_out, b_out):
    B, T = x_ids.shape
    H = w_hh.shape[0]
    O = w_out.shape[0]

    # Glue (index/layout prep only): time-major flattened ids so timestep t of
    # the projected inputs is a contiguous row block inside the kernel, and
    # weights pre-transposed so all in-kernel dots are plain A @ B.
    ids_col = x_ids.T.reshape(T * B, 1).astype(jnp.int32)

    vmem = pl.BlockSpec(memory_space=pltpu.MemorySpace.VMEM)

    return pl.pallas_call(
        rnn_head_kernel,
        out_shape=jax.ShapeDtypeStruct((B, O), jnp.float32),
        in_specs=[vmem] * 8,
        out_specs=vmem,
    )(ids_col, emb_table, w_ih.T, w_hh.T,
      b_ih.reshape(1, H), b_hh.reshape(1, H), w_out.T, b_out.reshape(1, O))


def _reference_forward(x_ids, emb_table, w_ih, w_hh, b_ih, b_hh, w_out, b_out):
    emb = jnp.take(emb_table, x_ids, axis=0)
    B, T, E = emb.shape
    H = w_hh.shape[0]
    h = jnp.zeros((B, H), jnp.float32)
    for t in range(T):
        h = jnp.tanh(emb[:, t, :] @ w_ih.T + b_ih + h @ w_hh.T + b_hh)
    logits = h @ w_out.T + b_out
    return jax.nn.softmax(logits, axis=1)


if __name__ == "__main__":
    # Small shapes consistent with the module.
    B, T = 2, 8
    input_dim, embedding_dim, hidden_dim, output_dim = 32, 16, 32, 8

    key = jax.random.PRNGKey(0)
    k_ids, k_emb, k_wih, k_whh, k_bih, k_bhh, k_wo, k_bo = jax.random.split(key, 8)

    x_ids = jax.random.randint(k_ids, (B, T), 0, input_dim, dtype=jnp.int32)

    # Deterministic synthetic parameters (uniform, PyTorch-like scale).
    s_rnn = 1.0 / jnp.sqrt(hidden_dim)
    emb_table = jax.random.normal(k_emb, (input_dim, embedding_dim), jnp.float32)
    w_ih = jax.random.uniform(k_wih, (hidden_dim, embedding_dim), jnp.float32, -s_rnn, s_rnn)
    w_hh = jax.random.uniform(k_whh, (hidden_dim, hidden_dim), jnp.float32, -s_rnn, s_rnn)
    b_ih = jax.random.uniform(k_bih, (hidden_dim,), jnp.float32, -s_rnn, s_rnn)
    b_hh = jax.random.uniform(k_bhh, (hidden_dim,), jnp.float32, -s_rnn, s_rnn)
    w_out = jax.random.uniform(k_wo, (output_dim, hidden_dim), jnp.float32, -s_rnn, s_rnn)
    b_out = jax.random.uniform(k_bo, (output_dim,), jnp.float32, -s_rnn, s_rnn)

    probs = rnn_model_forward(x_ids, emb_table, w_ih, w_hh, b_ih, b_hh, w_out, b_out)
    probs = jax.block_until_ready(probs)

    ref = _reference_forward(x_ids, emb_table, w_ih, w_hh, b_ih, b_hh, w_out, b_out)
    assert probs.shape == (B, output_dim)
    assert jnp.allclose(probs, ref, atol=1e-5, rtol=1e-5), "mismatch vs reference"

    print("KERNEL_OK")
</pallas_src>

<mosaic_0001>
module attributes {stable_mosaic.version = 11 : i64} {
  func.func @rnn_head_kernel(%arg0: memref<16x1xi32, #tpu.memory_space<vmem>>, %arg1: memref<32x16xf32, #tpu.memory_space<vmem>>, %arg2: memref<16x32xf32, #tpu.memory_space<vmem>>, %arg3: memref<32x32xf32, #tpu.memory_space<vmem>>, %arg4: memref<1x32xf32, #tpu.memory_space<vmem>>, %arg5: memref<1x32xf32, #tpu.memory_space<vmem>>, %arg6: memref<32x8xf32, #tpu.memory_space<vmem>>, %arg7: memref<1x8xf32, #tpu.memory_space<vmem>>, %arg8: memref<2x8xf32, #tpu.memory_space<vmem>>) attributes {dimension_semantics = [], scalar_prefetch = 0 : i64, scratch_operands = 0 : i64, tpu.core_type = #tpu.core_type<tc>} {
    %c0 = arith.constant 0 : index
    %c0_0 = arith.constant 0 : index
    %0 = vector.load %arg1[%c0, %c0_0] : memref<32x16xf32, #tpu.memory_space<vmem>>, vector<32x16xf32>
    %c0_1 = arith.constant 0 : index
    %c0_2 = arith.constant 0 : index
    %1 = vector.load %arg2[%c0_1, %c0_2] : memref<16x32xf32, #tpu.memory_space<vmem>>, vector<16x32xf32>
    %cst = arith.constant dense<0.000000e+00> : vector<32x32xf32>
    %2 = tpu.matmul %0, %1, %cst {dimension_numbers = #tpu.dot_dimension_numbers<[1], [0], [0], [1], [0, 0, 1, 1], [], []>} : vector<32x16xf32>, vector<16x32xf32>, vector<32x32xf32> -> vector<32x32xf32>
    %c0_3 = arith.constant 0 : index
    %c0_4 = arith.constant 0 : index
    %3 = vector.load %arg0[%c0_3, %c0_4] : memref<16x1xi32, #tpu.memory_space<vmem>>, vector<16x1xi32>
    %4 = tpu.iota {dimensions = array<i32: 1>} : vector<16x32xi32>
    %5 = vector.broadcast %3 : vector<16x1xi32> to vector<16x32xi32>
    %6 = arith.cmpi eq, %4, %5 : vector<16x32xi32>
    %7 = arith.extui %6 : vector<16x32xi1> to vector<16x32xi32>
    %8 = arith.sitofp %7 : vector<16x32xi32> to vector<16x32xf32>
    %c0_5 = arith.constant 0 : index
    %c0_6 = arith.constant 0 : index
    %9 = vector.load %arg4[%c0_5, %c0_6] : memref<1x32xf32, #tpu.memory_space<vmem>>, vector<1x32xf32>
    %c0_7 = arith.constant 0 : index
    %c0_8 = arith.constant 0 : index
    %10 = vector.load %arg5[%c0_7, %c0_8] : memref<1x32xf32, #tpu.memory_space<vmem>>, vector<1x32xf32>
    %11 = arith.addf %9, %10 : vector<1x32xf32>
    %cst_9 = arith.constant dense<0.000000e+00> : vector<16x32xf32>
    %12 = tpu.matmul %8, %2, %cst_9 {dimension_numbers = #tpu.dot_dimension_numbers<[1], [0], [0], [1], [0, 0, 1, 1], [], []>} : vector<16x32xf32>, vector<32x32xf32>, vector<16x32xf32> -> vector<16x32xf32>
    %13 = vector.broadcast %11 : vector<1x32xf32> to vector<16x32xf32>
    %14 = arith.addf %12, %13 : vector<16x32xf32>
    %c0_10 = arith.constant 0 : index
    %c0_11 = arith.constant 0 : index
    %15 = vector.load %arg3[%c0_10, %c0_11] : memref<32x32xf32, #tpu.memory_space<vmem>>, vector<32x32xf32>
    %cst_12 = arith.constant 0.000000e+00 : f32
    %16 = vector.broadcast %cst_12 : f32 to vector<2x32xf32>
    %17 = vector.extract_strided_slice %14 {offsets = [0, 0], sizes = [2, 32], strides = [1, 1]} : vector<16x32xf32> to vector<2x32xf32>
    %cst_13 = arith.constant dense<0.000000e+00> : vector<2x32xf32>
    %18 = tpu.matmul %16, %15, %cst_13 {dimension_numbers = #tpu.dot_dimension_numbers<[1], [0], [0], [1], [0, 0, 1, 1], [], []>} : vector<2x32xf32>, vector<32x32xf32>, vector<2x32xf32> -> vector<2x32xf32>
    %19 = arith.addf %17, %18 : vector<2x32xf32>
    %20 = math.tanh %19 : vector<2x32xf32>
    %21 = vector.extract_strided_slice %14 {offsets = [2, 0], sizes = [2, 32], strides = [1, 1]} : vector<16x32xf32> to vector<2x32xf32>
    %cst_14 = arith.constant dense<0.000000e+00> : vector<2x32xf32>
    %22 = tpu.matmul %20, %15, %cst_14 {dimension_numbers = #tpu.dot_dimension_numbers<[1], [0], [0], [1], [0, 0, 1, 1], [], []>} : vector<2x32xf32>, vector<32x32xf32>, vector<2x32xf32> -> vector<2x32xf32>
    %23 = arith.addf %21, %22 : vector<2x32xf32>
    %24 = math.tanh %23 : vector<2x32xf32>
    %25 = vector.extract_strided_slice %14 {offsets = [4, 0], sizes = [2, 32], strides = [1, 1]} : vector<16x32xf32> to vector<2x32xf32>
    %cst_15 = arith.constant dense<0.000000e+00> : vector<2x32xf32>
    %26 = tpu.matmul %24, %15, %cst_15 {dimension_numbers = #tpu.dot_dimension_numbers<[1], [0], [0], [1], [0, 0, 1, 1], [], []>} : vector<2x32xf32>, vector<32x32xf32>, vector<2x32xf32> -> vector<2x32xf32>
    %27 = arith.addf %25, %26 : vector<2x32xf32>
    %28 = math.tanh %27 : vector<2x32xf32>
    %29 = vector.extract_strided_slice %14 {offsets = [6, 0], sizes = [2, 32], strides = [1, 1]} : vector<16x32xf32> to vector<2x32xf32>
    %cst_16 = arith.constant dense<0.000000e+00> : vector<2x32xf32>
    %30 = tpu.matmul %28, %15, %cst_16 {dimension_numbers = #tpu.dot_dimension_numbers<[1], [0], [0], [1], [0, 0, 1, 1], [], []>} : vector<2x32xf32>, vector<32x32xf32>, vector<2x32xf32> -> vector<2x32xf32>
    %31 = arith.addf %29, %30 : vector<2x32xf32>
    %32 = math.tanh %31 : vector<2x32xf32>
    %33 = vector.extract_strided_slice %14 {offsets = [8, 0], sizes = [2, 32], strides = [1, 1]} : vector<16x32xf32> to vector<2x32xf32>
    %cst_17 = arith.constant dense<0.000000e+00> : vector<2x32xf32>
    %34 = tpu.matmul %32, %15, %cst_17 {dimension_numbers = #tpu.dot_dimension_numbers<[1], [0], [0], [1], [0, 0, 1, 1], [], []>} : vector<2x32xf32>, vector<32x32xf32>, vector<2x32xf32> -> vector<2x32xf32>
    %35 = arith.addf %33, %34 : vector<2x32xf32>
    %36 = math.tanh %35 : vector<2x32xf32>
    %37 = vector.extract_strided_slice %14 {offsets = [10, 0], sizes = [2, 32], strides = [1, 1]} : vector<16x32xf32> to vector<2x32xf32>
    %cst_18 = arith.constant dense<0.000000e+00> : vector<2x32xf32>
    %38 = tpu.matmul %36, %15, %cst_18 {dimension_numbers = #tpu.dot_dimension_numbers<[1], [0], [0], [1], [0, 0, 1, 1], [], []>} : vector<2x32xf32>, vector<32x32xf32>, vector<2x32xf32> -> vector<2x32xf32>
    %39 = arith.addf %37, %38 : vector<2x32xf32>
    %40 = math.tanh %39 : vector<2x32xf32>
    %41 = vector.extract_strided_slice %14 {offsets = [12, 0], sizes = [2, 32], strides = [1, 1]} : vector<16x32xf32> to vector<2x32xf32>
    %cst_19 = arith.constant dense<0.000000e+00> : vector<2x32xf32>
    %42 = tpu.matmul %40, %15, %cst_19 {dimension_numbers = #tpu.dot_dimension_numbers<[1], [0], [0], [1], [0, 0, 1, 1], [], []>} : vector<2x32xf32>, vector<32x32xf32>, vector<2x32xf32> -> vector<2x32xf32>
    %43 = arith.addf %41, %42 : vector<2x32xf32>
    %44 = math.tanh %43 : vector<2x32xf32>
    %45 = vector.extract_strided_slice %14 {offsets = [14, 0], sizes = [2, 32], strides = [1, 1]} : vector<16x32xf32> to vector<2x32xf32>
    %cst_20 = arith.constant dense<0.000000e+00> : vector<2x32xf32>
    %46 = tpu.matmul %44, %15, %cst_20 {dimension_numbers = #tpu.dot_dimension_numbers<[1], [0], [0], [1], [0, 0, 1, 1], [], []>} : vector<2x32xf32>, vector<32x32xf32>, vector<2x32xf32> -> vector<2x32xf32>
    %47 = arith.addf %45, %46 : vector<2x32xf32>
    %48 = math.tanh %47 : vector<2x32xf32>
    %c0_21 = arith.constant 0 : index
    %c0_22 = arith.constant 0 : index
    %49 = vector.load %arg6[%c0_21, %c0_22] : memref<32x8xf32, #tpu.memory_space<vmem>>, vector<32x8xf32>
    %cst_23 = arith.constant dense<0.000000e+00> : vector<2x8xf32>
    %50 = tpu.matmul %48, %49, %cst_23 {dimension_numbers = #tpu.dot_dimension_numbers<[1], [0], [0], [1], [0, 0, 1, 1], [], []>} : vector<2x32xf32>, vector<32x8xf32>, vector<2x8xf32> -> vector<2x8xf32>
    %c0_24 = arith.constant 0 : index
    %c0_25 = arith.constant 0 : index
    %51 = vector.load %arg7[%c0_24, %c0_25] : memref<1x8xf32, #tpu.memory_space<vmem>>, vector<1x8xf32>
    %52 = vector.broadcast %51 : vector<1x8xf32> to vector<2x8xf32>
    %53 = arith.addf %50, %52 : vector<2x8xf32>
    %cst_26 = arith.constant dense<0xFF800000> : vector<2xf32>
    %54 = vector.multi_reduction <maximumf>, %53, %cst_26 [1] : vector<2x8xf32> to vector<2xf32>
    %55 = vector.shape_cast %54 : vector<2xf32> to vector<2x1xf32>
    %56 = vector.broadcast %55 : vector<2x1xf32> to vector<2x8xf32>
    %57 = arith.subf %53, %56 : vector<2x8xf32>
    %58 = math.exp %57 : vector<2x8xf32>
    %cst_27 = arith.constant dense<0.000000e+00> : vector<2xf32>
    %59 = vector.multi_reduction <add>, %58, %cst_27 [1] : vector<2x8xf32> to vector<2xf32>
    %60 = vector.shape_cast %59 : vector<2xf32> to vector<2x1xf32>
    %61 = tpu.reciprocal %60 {approx = true} : vector<2x1xf32> -> vector<2x1xf32>
    %62 = arith.mulf %60, %61 : vector<2x1xf32>
    %cst_28 = arith.constant 2.000000e+00 : f32
    %63 = vector.broadcast %cst_28 : f32 to vector<2x1xf32>
    %64 = arith.subf %63, %62 : vector<2x1xf32>
    %65 = arith.mulf %61, %64 : vector<2x1xf32>
    %66 = vector.broadcast %65 : vector<2x1xf32> to vector<2x8xf32>
    %67 = arith.mulf %58, %66 : vector<2x8xf32>
    %c0_29 = arith.constant 0 : index
    %c0_30 = arith.constant 0 : index
    %68 = vector.load %arg8[%c0_29, %c0_30] : memref<2x8xf32, #tpu.memory_space<vmem>>, vector<2x8xf32>
    tpu.vector_store %arg8[%c0_29, %c0_30], %67 {strides = array<i32>} : memref<2x8xf32, #tpu.memory_space<vmem>>, vector<2x8xf32>,
    return
  }
}

</mosaic_0001>

<llo_original>
// kernel: tpu_custom_call.1
$region0: #{tpu_custom_call.1}
  #allocation0 [shape = 'u32[]', space=smem, size = 0x4, offset = 0x4, fixed_abs, tag = 'smem constant byte address 0x4 - core index']
  #allocation1 [shape = 'u32[72,128]{1,0:T(1,128)}', space=vmem, size = 0x9000, scoped, tag = 'internal scratch']
  %s0 = inlined_call_operand.vmem [shape: s32[16,1], index: 0, kind: input, shape index: {}]
  %s1 = inlined_call_operand.vmem [shape: f32[32,16], index: 1, kind: input, shape index: {}]
  %s2 = inlined_call_operand.vmem [shape: f32[16,32], index: 2, kind: input, shape index: {}]
  %s3 = inlined_call_operand.vmem [shape: f32[32,32], index: 3, kind: input, shape index: {}]
  %s4 = inlined_call_operand.vmem [shape: f32[1,32], index: 4, kind: input, shape index: {}]
  %s5 = inlined_call_operand.vmem [shape: f32[1,32], index: 5, kind: input, shape index: {}]
  %s6 = inlined_call_operand.vmem [shape: f32[32,8], index: 6, kind: input, shape index: {}]
  %s7 = inlined_call_operand.vmem [shape: f32[1,8], index: 7, kind: input, shape index: {}]
  %s8 = inlined_call_operand.hbm [shape: f32[2,8], index: 8, kind: output, shape index: {}]
  %s9 = sld [smem:[#allocation0]]
  $region42: #{tpu_custom_call.1} parent=0
    _
  %s11 = ssub.s32 1, %s9
  %s12 = scalar_select 0, %s11, %s9
  $region1: #{tpu_custom_call.1} parent=0
    #allocation2 [shape = 'u8[1024]{0}', space=vmem, size = 0x400, scoped, tag = 'output window, operand 0, single buffered']
    #allocation3 [shape = 's32[1]{0}', space=sflag, size = 0x4, scoped, tag = 'scoped memory for tpu_custom_call.1']
    %13 = vsyncpa [#allocation3], 0
    // Predicated region
    $region2: #{tpu_custom_call.1} parent=1 // pred_check
      _
    $region3: #{tpu_custom_call.1} parent=1 // pred_check_branch
      %15 = sbr.rel (0) target = $region5
    $region4: #{tpu_custom_call.1} parent=1 // pred_region
      _
    $region5: #{tpu_custom_call.1} parent=1 // pred_fallthru
      _
    // Predicated region
    $region6: #{tpu_custom_call.1} parent=1 // pred_check
      _
    $region7: #{tpu_custom_call.1} parent=1 // pred_check_branch
      %17 = sbr.rel (0) target = $region9
    $region8: #{tpu_custom_call.1} parent=1 // pred_region
      _
    $region9: #{tpu_custom_call.1} parent=1 // pred_fallthru
      _
    // Predicated region
    $region10: #{tpu_custom_call.1} parent=1 // pred_check
      _
    $region11: #{tpu_custom_call.1} parent=1 // pred_check_branch
      %19 = sbr.rel (0) target = $region13
    $region12: #{tpu_custom_call.1} parent=1 // pred_region
      _
    $region13: #{tpu_custom_call.1} parent=1 // pred_fallthru
      _
    // Predicated region
    $region14: #{tpu_custom_call.1} parent=1 // pred_check
      _
    $region15: #{tpu_custom_call.1} parent=1 // pred_check_branch
      %21 = sbr.rel (0) target = $region17
    $region16: #{tpu_custom_call.1} parent=1 // pred_region
      _
    $region17: #{tpu_custom_call.1} parent=1 // pred_fallthru
      _
    // Predicated region
    $region18: #{tpu_custom_call.1} parent=1 // pred_check
      _
    $region19: #{tpu_custom_call.1} parent=1 // pred_check_branch
      %23 = sbr.rel (0) target = $region21
    $region20: #{tpu_custom_call.1} parent=1 // pred_region
      _
    $region21: #{tpu_custom_call.1} parent=1 // pred_fallthru
      _
    // Predicated region
    $region22: #{tpu_custom_call.1} parent=1 // pred_check
      _
    $region23: #{tpu_custom_call.1} parent=1 // pred_check_branch
      %25 = sbr.rel (0) target = $region25
    $region24: #{tpu_custom_call.1} parent=1 // pred_region
      _
    $region25: #{tpu_custom_call.1} parent=1 // pred_fallthru
      _
    // Predicated region
    $region26: #{tpu_custom_call.1} parent=1 // pred_check
      _
    $region27: #{tpu_custom_call.1} parent=1 // pred_check_branch
      %27 = sbr.rel (0) target = $region29
    $region28: #{tpu_custom_call.1} parent=1 // pred_region
      _
    $region29: #{tpu_custom_call.1} parent=1 // pred_fallthru
      _
    // Predicated region
    $region30: #{tpu_custom_call.1} parent=1 // pred_check
      _
    $region31: #{tpu_custom_call.1} parent=1 // pred_check_branch
      %29 = sbr.rel (0) target = $region33
    $region32: #{tpu_custom_call.1} parent=1 // pred_region
      _
    $region33: #{tpu_custom_call.1} parent=1 // pred_fallthru
      _
    %v30 = vld [vmem:[%s1] sm:$0xff]
    %v31 = vld [vmem:[%s1 + $0x8] sm:$0xff]
    %v32 = vld [vmem:[%s1 + $0x10] sm:$0xff]
    %v33 = vld [vmem:[%s1 + $0x18] sm:$0xff]
    %v34 = vld [vmem:[%s2] sm:$0xff]
    %v35 = vld [vmem:[%s2 + $0x8] sm:$0xff]
    %vm36 = vcmask 130048
    %v38 = vsel %vm36, %v30, 0
    %v41 = vsel %vm36, %v31, 0
    %v44 = vsel %vm36, %v32, 0
    %v47 = vsel %vm36, %v33, 0
    %49 = vmatpush.msra.mxu0 0.0
    %50 = vmatpush.msra.mxu0 0.0
    %51 = vmatpush.msra.mxu0 0.0
    %52 = vmatpush.msra.mxu0 0.0
    %53 = vmatpush.msra.mxu0 0.0
    %54 = vmatpush.msra.mxu0 0.0
    %55 = vmatpush.msra.mxu0 0.0
    %56 = vmatpush.msra.mxu0 0.0
    %57 = vmatpush.msra.mxu0 0.0
    %58 = vmatpush.msra.mxu0 0.0
    %59 = vmatpush.msra.mxu0 0.0
    %60 = vmatpush.msra.mxu0 0.0
    %61 = vmatpush.msra.mxu0 0.0
    %62 = vmatpush.msra.mxu0 0.0
    %63 = vmatpush.msra.mxu0 %v35
    %64 = vmatpush.msra.mxu0 %v34
    %65 = vmatmul.f32.gmra.mxu0 %v38
    %v66 = vpop.f32.mrf.mxu0
    %v67 = vadd.f32 0.0, %v66
    %68 = vmatmul.f32.gmra.mxu0 %v41
    %v69 = vpop.f32.mrf.mxu0
    %v70 = vadd.f32 0.0, %v69
    %71 = vmatmul.f32.gmra.mxu0 %v44
    %v72 = vpop.f32.mrf.mxu0
    %v73 = vadd.f32 0.0, %v72
    %74 = vmatmul.f32.gmra.mxu0 %v47
    %v75 = vpop.f32.mrf.mxu0
    %v76 = vadd.f32 0.0, %v75
    %77 = vdwg.mxu0
    %v78 = vld [vmem:[%s0] sm:$0xff]
    %v79 = vld [vmem:[%s0 + $0x8] sm:$0xff]
    %v80 = vlaneseq
    %v81 = vand.u32 %v80, 127
    %82 = vset.pattern.permute.xlu0 0
    %83 = vperm.xlu0 %82, %v78
    %v84 = vpop.permute.xlu0 %83
    %85 = vset.pattern.permute.xlu0 0
    %86 = vperm.xlu0 %85, %v79
    %v87 = vpop.permute.xlu0 %86
    %vm88 = vcmp.eq.s32.totalorder %v81, %v84
    %vm89 = vcmp.eq.s32.totalorder %v81, %v87
    %v90 = vsel %vm88, 1, 0
    %v91 = vsel %vm89, 1, 0
    %v92 = vcvt.s32.f32 %v90
    %v93 = vcvt.s32.f32 %v91
    %v94 = vld [vmem:[%s4] sm:$0x1]
    %v95 = vld [vmem:[%s5] sm:$0x1]
    %v96 = vadd.f32 %v94, %v95
    %v98 = vperm.slane %v96, 0
    %vm100 = vcmask 261120
    %v102 = vsel %vm100, %v92, 0
    %v105 = vsel %vm100, %v93, 0
    %107 = vmatpush.msra.mxu0 0.0
    %108 = vmatpush.msra.mxu0 0.0
    %109 = vmatpush.msra.mxu0 0.0
    %110 = vmatpush.msra.mxu0 0.0
    %111 = vmatpush.msra.mxu0 0.0
    %112 = vmatpush.msra.mxu0 0.0
    %113 = vmatpush.msra.mxu0 0.0
    %114 = vmatpush.msra.mxu0 0.0
    %115 = vmatpush.msra.mxu0 0.0
    %116 = vmatpush.msra.mxu0 0.0
    %117 = vmatpush.msra.mxu0 0.0
    %118 = vmatpush.msra.mxu0 0.0
    %119 = vmatpush.msra.mxu0 %v76
    %120 = vmatpush.msra.mxu0 %v73
    %121 = vmatpush.msra.mxu0 %v70
    %122 = vmatpush.msra.mxu0 %v67
    %123 = vmatmul.f32.gmra.mxu0 %v102
    %v124 = vpop.f32.mrf.mxu0
    %v125 = vadd.f32 %v98, %v124
    %126 = vmatmul.f32.gmra.mxu0 %v105
    %v127 = vpop.f32.mrf.mxu0
    %v128 = vadd.f32 %v98, %v127
    %129 = vdwg.mxu0
    %v130 = vld [vmem:[%s3] sm:$0xff]
    %v131 = vld [vmem:[%s3 + $0x8] sm:$0xff]
    %v132 = vld [vmem:[%s3 + $0x10] sm:$0xff]
    %v133 = vld [vmem:[%s3 + $0x18] sm:$0xff]
    %v135 = vsel %vm100, 0.0, 0
    %137 = vmatpush.msra.mxu0 0.0
    %138 = vmatpush.msra.mxu0 0.0
    %139 = vmatpush.msra.mxu0 0.0
    %140 = vmatpush.msra.mxu0 0.0
    %141 = vmatpush.msra.mxu0 0.0
    %142 = vmatpush.msra.mxu0 0.0
    %143 = vmatpush.msra.mxu0 0.0
    %144 = vmatpush.msra.mxu0 0.0
    %145 = vmatpush.msra.mxu0 0.0
    %146 = vmatpush.msra.mxu0 0.0
    %147 = vmatpush.msra.mxu0 0.0
    %148 = vmatpush.msra.mxu0 0.0
    %149 = vmatpush.msra.mxu0 %v133
    %150 = vmatpush.msra.mxu0 %v132
    %151 = vmatpush.msra.mxu0 %v131
    %152 = vmatpush.msra.mxu0 %v130
    %153 = vmatmul.f32.gmra.mxu0 %v135
    %v154 = vpop.f32.mrf.mxu0
    %v155 = vadd.f32 0.0, %v154
    %156 = vdwg.mxu0
    %v157 = vadd.f32 %v125, %v155
    %v158 = vtanh.pop %v157
    %v160 = vsel %vm100, %v158, 0
    %162 = vmatpush.msra.mxu0 0.0
    %163 = vmatpush.msra.mxu0 0.0
    %164 = vmatpush.msra.mxu0 0.0
    %165 = vmatpush.msra.mxu0 0.0
    %166 = vmatpush.msra.mxu0 0.0
    %167 = vmatpush.msra.mxu0 0.0
    %168 = vmatpush.msra.mxu0 0.0
    %169 = vmatpush.msra.mxu0 0.0
    %170 = vmatpush.msra.mxu0 0.0
    %171 = vmatpush.msra.mxu0 0.0
    %172 = vmatpush.msra.mxu0 0.0
    %173 = vmatpush.msra.mxu0 0.0
    %174 = vmatpush.msra.mxu0 %v133
    %175 = vmatpush.msra.mxu0 %v132
    %176 = vmatpush.msra.mxu0 %v131
    %177 = vmatpush.msra.mxu0 %v130
    %178 = vmatmul.f32.gmra.mxu0 %v160
    %v179 = vpop.f32.mrf.mxu0
    %v180 = vadd.f32 0.0, %v179
    %181 = vdwg.mxu0
    %v183 = vrot.slane %v180, 6
    %v185 = vadd.f32 %v125, %v183
    %v186 = vtanh.pop %v185
    %v188 = vrot.slane %v186, 2
    %v189 = vsel %vm100, %v188, 0
    %191 = vmatpush.msra.mxu0 0.0
    %192 = vmatpush.msra.mxu0 0.0
    %193 = vmatpush.msra.mxu0 0.0
    %194 = vmatpush.msra.mxu0 0.0
    %195 = vmatpush.msra.mxu0 0.0
    %196 = vmatpush.msra.mxu0 0.0
    %197 = vmatpush.msra.mxu0 0.0
    %198 = vmatpush.msra.mxu0 0.0
    %199 = vmatpush.msra.mxu0 0.0
    %200 = vmatpush.msra.mxu0 0.0
    %201 = vmatpush.msra.mxu0 0.0
    %202 = vmatpush.msra.mxu0 0.0
    %203 = vmatpush.msra.mxu0 %v133
    %204 = vmatpush.msra.mxu0 %v132
    %205 = vmatpush.msra.mxu0 %v131
    %206 = vmatpush.msra.mxu0 %v130
    %207 = vmatmul.f32.gmra.mxu0 %v189
    %v208 = vpop.f32.mrf.mxu0
    %v209 = vadd.f32 0.0, %v208
    %210 = vdwg.mxu0
    %v212 = vrot.slane %v209, 4
    %v214 = vadd.f32 %v125, %v212
    %v215 = vtanh.pop %v214
    %v217 = vrot.slane %v215, 4
    %v218 = vsel %vm100, %v217, 0
    %220 = vmatpush.msra.mxu0 0.0
    %221 = vmatpush.msra.mxu0 0.0
    %222 = vmatpush.msra.mxu0 0.0
    %223 = vmatpush.msra.mxu0 0.0
    %224 = vmatpush.msra.mxu0 0.0
    %225 = vmatpush.msra.mxu0 0.0
    %226 = vmatpush.msra.mxu0 0.0
    %227 = vmatpush.msra.mxu0 0.0
    %228 = vmatpush.msra.mxu0 0.0
    %229 = vmatpush.msra.mxu0 0.0
    %230 = vmatpush.msra.mxu0 0.0
    %231 = vmatpush.msra.mxu0 0.0
    %232 = vmatpush.msra.mxu0 %v133
    %233 = vmatpush.msra.mxu0 %v132
    %234 = vmatpush.msra.mxu0 %v131
    %235 = vmatpush.msra.mxu0 %v130
    %236 = vmatmul.f32.gmra.mxu0 %v218
    %v237 = vpop.f32.mrf.mxu0
    %v238 = vadd.f32 0.0, %v237
    %239 = vdwg.mxu0
    %v241 = vrot.slane %v238, 2
    %v243 = vadd.f32 %v125, %v241
    %v244 = vtanh.pop %v243
    %v246 = vrot.slane %v244, 6
    %v247 = vsel %vm100, %v246, 0
    %249 = vmatpush.msra.mxu0 0.0
    %250 = vmatpush.msra.mxu0 0.0
    %251 = vmatpush.msra.mxu0 0.0
    %252 = vmatpush.msra.mxu0 0.0
    %253 = vmatpush.msra.mxu0 0.0
    %254 = vmatpush.msra.mxu0 0.0
    %255 = vmatpush.msra.mxu0 0.0
    %256 = vmatpush.msra.mxu0 0.0
    %257 = vmatpush.msra.mxu0 0.0
    %258 = vmatpush.msra.mxu0 0.0
    %259 = vmatpush.msra.mxu0 0.0
    %260 = vmatpush.msra.mxu0 0.0
    %261 = vmatpush.msra.mxu0 %v133
    %262 = vmatpush.msra.mxu0 %v132
    %263 = vmatpush.msra.mxu0 %v131
    %264 = vmatpush.msra.mxu0 %v130
    %265 = vmatmul.f32.gmra.mxu0 %v247
    %v266 = vpop.f32.mrf.mxu0
    %v267 = vadd.f32 0.0, %v266
    %268 = vdwg.mxu0
    %v269 = vadd.f32 %v128, %v267
    %v270 = vtanh.pop %v269
    %v272 = vsel %vm100, %v270, 0
    %274 = vmatpush.msra.mxu0 0.0
    %275 = vmatpush.msra.mxu0 0.0
    %276 = vmatpush.msra.mxu0 0.0
    %277 = vmatpush.msra.mxu0 0.0
    %278 = vmatpush.msra.mxu0 0.0
    %279 = vmatpush.msra.mxu0 0.0
    %280 = vmatpush.msra.mxu0 0.0
    %281 = vmatpush.msra.mxu0 0.0
    %282 = vmatpush.msra.mxu0 0.0
    %283 = vmatpush.msra.mxu0 0.0
    %284 = vmatpush.msra.mxu0 0.0
    %285 = vmatpush.msra.mxu0 0.0
    %286 = vmatpush.msra.mxu0 %v133
    %287 = vmatpush.msra.mxu0 %v132
    %288 = vmatpush.msra.mxu0 %v131
    %289 = vmatpush.msra.mxu0 %v130
    %290 = vmatmul.f32.gmra.mxu0 %v272
    %v291 = vpop.f32.mrf.mxu0
    %v292 = vadd.f32 0.0, %v291
    %293 = vdwg.mxu0
    %v295 = vrot.slane %v292, 6
    %v297 = vadd.f32 %v128, %v295
    %v298 = vtanh.pop %v297
    %v300 = vrot.slane %v298, 2
    %v301 = vsel %vm100, %v300, 0
    %303 = vmatpush.msra.mxu0 0.0
    %304 = vmatpush.msra.mxu0 0.0
    %305 = vmatpush.msra.mxu0 0.0
    %306 = vmatpush.msra.mxu0 0.0
    %307 = vmatpush.msra.mxu0 0.0
    %308 = vmatpush.msra.mxu0 0.0
    %309 = vmatpush.msra.mxu0 0.0
    %310 = vmatpush.msra.mxu0 0.0
    %311 = vmatpush.msra.mxu0 0.0
    %312 = vmatpush.msra.mxu0 0.0
    %313 = vmatpush.msra.mxu0 0.0
    %314 = vmatpush.msra.mxu0 0.0
    %315 = vmatpush.msra.mxu0 %v133
    %316 = vmatpush.msra.mxu0 %v132
    %317 = vmatpush.msra.mxu0 %v131
    %318 = vmatpush.msra.mxu0 %v130
    %319 = vmatmul.f32.gmra.mxu0 %v301
    %v320 = vpop.f32.mrf.mxu0
    %v321 = vadd.f32 0.0, %v320
    %322 = vdwg.mxu0
    %v324 = vrot.slane %v321, 4
    %v326 = vadd.f32 %v128, %v324
    %v327 = vtanh.pop %v326
    %v329 = vrot.slane %v327, 4
    %v330 = vsel %vm100, %v329, 0
    %332 = vmatpush.msra.mxu0 0.0
    %333 = vmatpush.msra.mxu0 0.0
    %334 = vmatpush.msra.mxu0 0.0
    %335 = vmatpush.msra.mxu0 0.0
    %336 = vmatpush.msra.mxu0 0.0
    %337 = vmatpush.msra.mxu0 0.0
    %338 = vmatpush.msra.mxu0 0.0
    %339 = vmatpush.msra.mxu0 0.0
    %340 = vmatpush.msra.mxu0 0.0
    %341 = vmatpush.msra.mxu0 0.0
    %342 = vmatpush.msra.mxu0 0.0
    %343 = vmatpush.msra.mxu0 0.0
    %344 = vmatpush.msra.mxu0 %v133
    %345 = vmatpush.msra.mxu0 %v132
    %346 = vmatpush.msra.mxu0 %v131
    %347 = vmatpush.msra.mxu0 %v130
    %348 = vmatmul.f32.gmra.mxu0 %v330
    %v349 = vpop.f32.mrf.mxu0
    %v350 = vadd.f32 0.0, %v349
    %351 = vdwg.mxu0
    %v353 = vrot.slane %v350, 2
    %v355 = vadd.f32 %v128, %v353
    %v356 = vtanh.pop %v355
    %v357 = vld [vmem:[%s6] sm:$0xff]
    %v358 = vld [vmem:[%s6 + $0x8] sm:$0xff]
    %v359 = vld [vmem:[%s6 + $0x10] sm:$0xff]
    %v360 = vld [vmem:[%s6 + $0x18] sm:$0xff]
    %v361 = vld [vmem:[%s7] sm:$0x1]
    %v363 = vperm.slane %v361, 0
    %v366 = vrot.slane %v356, 6
    %v367 = vsel %vm100, %v366, 0
    %369 = vmatpush.msra.mxu0 0.0
    %370 = vmatpush.msra.mxu0 0.0
    %371 = vmatpush.msra.mxu0 0.0
    %372 = vmatpush.msra.mxu0 0.0
    %373 = vmatpush.msra.mxu0 0.0
    %374 = vmatpush.msra.mxu0 0.0
    %375 = vmatpush.msra.mxu0 0.0
    %376 = vmatpush.msra.mxu0 0.0
    %377 = vmatpush.msra.mxu0 0.0
    %378 = vmatpush.msra.mxu0 0.0
    %379 = vmatpush.msra.mxu0 0.0
    %380 = vmatpush.msra.mxu0 0.0
    %381 = vmatpush.msra.mxu0 %v360
    %382 = vmatpush.msra.mxu0 %v359
    %383 = vmatpush.msra.mxu0 %v358
    %384 = vmatpush.msra.mxu0 %v357
    %385 = vmatmul.f32.gmra.mxu0 %v367
    %v386 = vpop.f32.mrf.mxu0
    %v387 = vadd.f32 %v363, %v386
    %388 = vdwg.mxu0
    %vm389 = vcmask 58368
    %v390 = vsel %vm389, %v387, -inf
    %391 = vmax.xlane.f32.xlu0 %v390
    %v392 = vpop.xlane.xlu0 %391
    %v393 = vsub.f32 %v387, %v392
    %v394 = vmul.f32 %v393, 1.442695
    %v395 = vpow.pop %v394
    %v396 = vsel %vm389, %v395, 0.0
    %397 = vadd.xlane.f32.xlu0 %v396
    %v398 = vpop.xlane.xlu0 %397
    %v399 = vrcp.pop %v398
    %v400 = vmul.f32 %v398, %v399
    %v401 = vsub.f32 2.0, %v400
    %v402 = vmul.f32 %v399, %v401
    %v403 = vmul.f32 %v395, %v402
    %404 = vst.msk [vmem:[#allocation2] sm:$0x3] %vm389, %v403
    // Predicated region
    $region34: #{tpu_custom_call.1} parent=1 // pred_check
      _
    $region35: #{tpu_custom_call.1} parent=1 // pred_check_branch
      %406 = sbr.rel (0) target = $region37
    $region36: #{tpu_custom_call.1} parent=1 // pred_region
      %408 = vsyncadd [#allocation3], 0
      %s410 = sshll.u32 [#allocation2], 4
      %s411 = int_to_ptr.vmem [resolvable:$true] %s410
      %s412 = sshll.u32 %s8, 4
      %s413 = int_to_ptr.hbm [resolvable:$true] %s412
      %415 = dma.vmem_to_hbm [thread:$0]  %s411, 32, %s413, [#allocation3]
    $region37: #{tpu_custom_call.1} parent=1 // pred_fallthru
      _
    // Predicated region
    $region38: #{tpu_custom_call.1} parent=1 // pred_check
      _
    $region39: #{tpu_custom_call.1} parent=1 // pred_check_branch
      %417 = sbr.rel (0) target = $region41
    $region40: #{tpu_custom_call.1} parent=1 // pred_region
      %419 = dma.done [#allocation3], 32
    $region41: #{tpu_custom_call.1} parent=1 // pred_fallthru
      _
    %420 = vsyncpa [#allocation3], 1

</llo_original>
